<compile_context>
chip_gen: v5e
topology: v5e:2x2
jax: 0.10.0
libtpu: 0.0.40
codegen_flags: <defaults>
</compile_context>

<pallas_src>
import math
import jax
import jax.numpy as jnp
from jax.experimental import pallas as pl
from jax.experimental.pallas import tpu as pltpu

H_DIM = 2
OUT_DIM = 3
K_CAT = 2 * H_DIM     # 4
N_CAT = 2 * OUT_DIM   # 6


def predictor_kernel(x_ref, wt_ref, b_ref, y_ref):
    # x:  (tb, 4)   concatenated [emb1 | emb0]
    # wt: (4, 6)    block-diagonal, already transposed: diag(W1^T, W0^T)
    # b:  (1, 6)    [b1 | b0]
    x = x_ref[...]
    wt = wt_ref[...]
    b = b_ref[...]
    # Unrolled VPU contraction: y = sum_k x[:, k:k+1] * wt[k:k+1, :]  + b
    acc = x[:, 0:1] * wt[0:1, :]
    for k in range(1, K_CAT):
        acc = acc + x[:, k:k + 1] * wt[k:k + 1, :]
    y_ref[...] = (acc + b).astype(y_ref.dtype)


def predictor_forward(emb1, emb0, w1, b1, w0, b0, *, tile_b=512):
    """Returns (pred_y1, pred_y0), matching torch Predictor.forward."""
    B = emb1.shape[0]

    # ---- wrapper-side packing (trace-time, fused by XLA) -------------------
    x_cat = jnp.concatenate([emb1, emb0], axis=1).astype(jnp.float32)  # (B, 4)

    # Block-diagonal, pre-transposed weight: (4, 6) = diag(W1^T, W0^T)
    wt = jnp.zeros((K_CAT, N_CAT), jnp.float32)
    wt = wt.at[:H_DIM, :OUT_DIM].set(w1.T)
    wt = wt.at[H_DIM:, OUT_DIM:].set(w0.T)
    b_cat = jnp.concatenate([b1, b0]).reshape(1, N_CAT).astype(jnp.float32)

    # ---- choose B tiling ---------------------------------------------------
    if B <= tile_b:
        tb = B          # single block covering the full batch
        b_pad = B
    else:
        tb = tile_b     # multiple of 8 -> satisfies (8,128) sublane rule
        b_pad = ((B + tb - 1) // tb) * tb
        if b_pad != B:
            x_cat = jnp.pad(x_cat, ((0, b_pad - B), (0, 0)))

    grid = (b_pad // tb,)

    y_cat = pl.pallas_call(
        predictor_kernel,
        out_shape=jax.ShapeDtypeStruct((b_pad, N_CAT), jnp.float32),
        grid=grid,
        in_specs=[
            pl.BlockSpec((tb, K_CAT), lambda i: (i, 0)),      # x_cat tile
            pl.BlockSpec((K_CAT, N_CAT), lambda i: (0, 0)),   # fused weight
            pl.BlockSpec((1, N_CAT), lambda i: (0, 0)),       # fused bias
        ],
        out_specs=pl.BlockSpec((tb, N_CAT), lambda i: (i, 0)),
        compiler_params=pltpu.CompilerParams(
            dimension_semantics=("parallel",),        # shard B across TCs (v7x)
            vmem_limit_bytes=32 * 1024 * 1024,        # safe on v5e/v6e/v7x
        ),
    )(x_cat, wt, b_cat)

    y_cat = y_cat[:B]
    pred_y1 = y_cat[:, :OUT_DIM]
    pred_y0 = y_cat[:, OUT_DIM:]
    return pred_y1, pred_y0


def init_linear_params(key, in_features, out_features):
    # Deterministic init mimicking torch.nn.Linear default:
    # U(-1/sqrt(in_features), 1/sqrt(in_features)) for weight and bias.
    kw, kb = jax.random.split(key)
    bound = 1.0 / math.sqrt(in_features)
    w = jax.random.uniform(kw, (out_features, in_features),
                           minval=-bound, maxval=bound, dtype=jnp.float32)
    b = jax.random.uniform(kb, (out_features,),
                           minval=-bound, maxval=bound, dtype=jnp.float32)
    return w, b


if __name__ == "__main__":
    key = jax.random.PRNGKey(0)
    k_emb1, k_emb0, k_nn0, k_nn1 = jax.random.split(key, 4)

    B = 8
    emb1 = jax.random.normal(k_emb1, (B, H_DIM), dtype=jnp.float32)
    emb0 = jax.random.normal(k_emb0, (B, H_DIM), dtype=jnp.float32)

    w0, b0 = init_linear_params(k_nn0, H_DIM, OUT_DIM)  # NN0
    w1, b1 = init_linear_params(k_nn1, H_DIM, OUT_DIM)  # NN1

    pred_y1, pred_y0 = predictor_forward(emb1, emb0, w1, b1, w0, b0)
    jax.block_until_ready((pred_y1, pred_y0))

    # Reference check against plain JAX (same semantics as torch Linear).
    ref_y1 = emb1 @ w1.T + b1
    ref_y0 = emb0 @ w0.T + b0
    assert jnp.allclose(pred_y1, ref_y1, atol=1e-5), "pred_y1 mismatch"
    assert jnp.allclose(pred_y0, ref_y0, atol=1e-5), "pred_y0 mismatch"

    print("KERNEL_OK")
</pallas_src>

<mosaic_0001>
module attributes {stable_mosaic.version = 11 : i64} {
  func.func @predictor_kernel(%arg0: i32, %arg1: memref<8x4xf32, #tpu.memory_space<vmem>>, %arg2: memref<4x6xf32, #tpu.memory_space<vmem>>, %arg3: memref<1x6xf32, #tpu.memory_space<vmem>>, %arg4: memref<8x6xf32, #tpu.memory_space<vmem>>) attributes {dimension_semantics = [#tpu.dimension_semantics<parallel>], iteration_bounds = array<i64: 1>, scalar_prefetch = 0 : i64, scratch_operands = 0 : i64, tpu.core_type = #tpu.core_type<tc>, window_params = [{transform_indices = @transform_0, window_bounds = array<i64: 8, 4>}, {pipeline_mode = #tpu.pipeline_mode<synchronous>, transform_indices = @transform_1, window_bounds = array<i64: 4, 6>}, {pipeline_mode = #tpu.pipeline_mode<synchronous>, transform_indices = @transform_2, window_bounds = array<i64: 1, 6>}, {transform_indices = @transform_3, window_bounds = array<i64: 8, 6>}]} {
    %c0 = arith.constant 0 : index
    %c0_0 = arith.constant 0 : index
    %0 = vector.load %arg1[%c0, %c0_0] : memref<8x4xf32, #tpu.memory_space<vmem>>, vector<8x4xf32>
    %c0_1 = arith.constant 0 : index
    %c0_2 = arith.constant 0 : index
    %1 = vector.load %arg2[%c0_1, %c0_2] : memref<4x6xf32, #tpu.memory_space<vmem>>, vector<4x6xf32>
    %c0_3 = arith.constant 0 : index
    %c0_4 = arith.constant 0 : index
    %2 = vector.load %arg3[%c0_3, %c0_4] : memref<1x6xf32, #tpu.memory_space<vmem>>, vector<1x6xf32>
    %3 = vector.extract_strided_slice %0 {offsets = [0, 0], sizes = [8, 1], strides = [1, 1]} : vector<8x4xf32> to vector<8x1xf32>
    %4 = vector.extract_strided_slice %1 {offsets = [0, 0], sizes = [1, 6], strides = [1, 1]} : vector<4x6xf32> to vector<1x6xf32>
    %5 = vector.broadcast %3 : vector<8x1xf32> to vector<8x6xf32>
    %6 = vector.broadcast %4 : vector<1x6xf32> to vector<8x6xf32>
    %7 = arith.mulf %5, %6 : vector<8x6xf32>
    %8 = vector.extract_strided_slice %0 {offsets = [0, 1], sizes = [8, 1], strides = [1, 1]} : vector<8x4xf32> to vector<8x1xf32>
    %9 = vector.extract_strided_slice %1 {offsets = [1, 0], sizes = [1, 6], strides = [1, 1]} : vector<4x6xf32> to vector<1x6xf32>
    %10 = vector.broadcast %8 : vector<8x1xf32> to vector<8x6xf32>
    %11 = vector.broadcast %9 : vector<1x6xf32> to vector<8x6xf32>
    %12 = arith.mulf %10, %11 : vector<8x6xf32>
    %13 = arith.addf %7, %12 : vector<8x6xf32>
    %14 = vector.extract_strided_slice %0 {offsets = [0, 2], sizes = [8, 1], strides = [1, 1]} : vector<8x4xf32> to vector<8x1xf32>
    %15 = vector.extract_strided_slice %1 {offsets = [2, 0], sizes = [1, 6], strides = [1, 1]} : vector<4x6xf32> to vector<1x6xf32>
    %16 = vector.broadcast %14 : vector<8x1xf32> to vector<8x6xf32>
    %17 = vector.broadcast %15 : vector<1x6xf32> to vector<8x6xf32>
    %18 = arith.mulf %16, %17 : vector<8x6xf32>
    %19 = arith.addf %13, %18 : vector<8x6xf32>
    %20 = vector.extract_strided_slice %0 {offsets = [0, 3], sizes = [8, 1], strides = [1, 1]} : vector<8x4xf32> to vector<8x1xf32>
    %21 = vector.extract_strided_slice %1 {offsets = [3, 0], sizes = [1, 6], strides = [1, 1]} : vector<4x6xf32> to vector<1x6xf32>
    %22 = vector.broadcast %20 : vector<8x1xf32> to vector<8x6xf32>
    %23 = vector.broadcast %21 : vector<1x6xf32> to vector<8x6xf32>
    %24 = arith.mulf %22, %23 : vector<8x6xf32>
    %25 = arith.addf %19, %24 : vector<8x6xf32>
    %26 = vector.broadcast %2 : vector<1x6xf32> to vector<8x6xf32>
    %27 = arith.addf %25, %26 : vector<8x6xf32>
    %c0_5 = arith.constant 0 : index
    %c0_6 = arith.constant 0 : index
    %28 = vector.load %arg4[%c0_5, %c0_6] : memref<8x6xf32, #tpu.memory_space<vmem>>, vector<8x6xf32>
    tpu.vector_store %arg4[%c0_5, %c0_6], %27 {strides = array<i32>} : memref<8x6xf32, #tpu.memory_space<vmem>>, vector<8x6xf32>,
    return
  }
  func.func @transform_0(%arg0: i32) -> (i32, i32) {
    %c0_i32 = arith.constant 0 : i32
    %c0_i32_0 = arith.constant 0 : i32
    return %arg0, %c0_i32 : i32, i32
  }
  func.func @transform_1(%arg0: i32) -> (i32, i32) {
    %c0_i32 = arith.constant 0 : i32
    %c0_i32_0 = arith.constant 0 : i32
    %c0_i32_1 = arith.constant 0 : i32
    return %c0_i32, %c0_i32_0 : i32, i32
  }
  func.func @transform_2(%arg0: i32) -> (i32, i32) {
    %c0_i32 = arith.constant 0 : i32
    %c0_i32_0 = arith.constant 0 : i32
    %c0_i32_1 = arith.constant 0 : i32
    return %c0_i32, %c0_i32_0 : i32, i32
  }
  func.func @transform_3(%arg0: i32) -> (i32, i32) {
    %c0_i32 = arith.constant 0 : i32
    %c0_i32_0 = arith.constant 0 : i32
    return %arg0, %c0_i32 : i32, i32
  }
}

</mosaic_0001>

<llo_original>
// kernel: tpu_custom_call.1
$region0: #{tpu_custom_call.1}
  #allocation0 [shape = 'u32[]', space=smem, size = 0x4, offset = 0x4, fixed_abs, tag = 'smem constant byte address 0x4 - core index']
  #allocation1 [shape = 'u32[72,128]{1,0:T(1,128)}', space=vmem, size = 0x9000, scoped, tag = 'internal scratch']
  %s0 = inlined_call_operand.vmem [shape: f32[8,4], index: 0, kind: input, shape index: {}]
  %s1 = inlined_call_operand.vmem [shape: f32[4,6], index: 1, kind: input, shape index: {}]
  %s2 = inlined_call_operand.vmem [shape: f32[1,6], index: 2, kind: input, shape index: {}]
  %s3 = inlined_call_operand.hbm [shape: f32[8,6], index: 3, kind: output, shape index: {}]
  %s4 = sld [smem:[#allocation0]]
  $region22: #{tpu_custom_call.1} parent=0
    _
  %s6 = ssub.s32 1, %s4
  %s7 = scalar_select 0, %s6, %s4
  $region1: #{tpu_custom_call.1} parent=0
    #allocation2 [shape = 'u8[4096]{0}', space=vmem, size = 0x1000, scoped, tag = 'output window, operand 0, single buffered']
    #allocation3 [shape = 's32[1]{0}', space=sflag, size = 0x4, scoped, tag = 'scoped memory for tpu_custom_call.1']
    %8 = vsyncpa [#allocation3], 0
    // Predicated region
    $region2: #{tpu_custom_call.1} parent=1 // pred_check
      _
    $region3: #{tpu_custom_call.1} parent=1 // pred_check_branch
      %10 = sbr.rel (0) target = $region5
    $region4: #{tpu_custom_call.1} parent=1 // pred_region
      _
    $region5: #{tpu_custom_call.1} parent=1 // pred_fallthru
      _
    // Predicated region
    $region6: #{tpu_custom_call.1} parent=1 // pred_check
      _
    $region7: #{tpu_custom_call.1} parent=1 // pred_check_branch
      %12 = sbr.rel (0) target = $region9
    $region8: #{tpu_custom_call.1} parent=1 // pred_region
      _
    $region9: #{tpu_custom_call.1} parent=1 // pred_fallthru
      _
    // Predicated region
    $region10: #{tpu_custom_call.1} parent=1 // pred_check
      _
    $region11: #{tpu_custom_call.1} parent=1 // pred_check_branch
      %14 = sbr.rel (0) target = $region13
    $region12: #{tpu_custom_call.1} parent=1 // pred_region
      _
    $region13: #{tpu_custom_call.1} parent=1 // pred_fallthru
      _
    %v15 = vld [vmem:[%s0] sm:$0xff]
    %v16 = vld [vmem:[%s1] sm:$0xf]
    %v17 = vld [vmem:[%s2] sm:$0x1]
    %19 = vset.pattern.permute.xlu0 0
    %20 = vperm.xlu0 %19, %v15
    %v21 = vpop.permute.xlu0 %20
    %v23 = vperm.slane %v16, 0
    %v24 = vmul.f32 %v21, %v23
    %25 = vset.pattern.permute.xlu0 1
    %26 = vperm.xlu0 %25, %v15
    %v27 = vpop.permute.xlu0 %26
    %v29 = vperm.slane %v16, 1
    %v30 = vmul.f32 %v27, %v29
    %v31 = vadd.f32 %v24, %v30
    %32 = vset.pattern.permute.xlu0 2
    %33 = vperm.xlu0 %32, %v15
    %v34 = vpop.permute.xlu0 %33
    %v36 = vperm.slane %v16, 2
    %v37 = vmul.f32 %v34, %v36
    %v38 = vadd.f32 %v31, %v37
    %39 = vset.pattern.permute.xlu0 3
    %40 = vperm.xlu0 %39, %v15
    %v41 = vpop.permute.xlu0 %40
    %v43 = vperm.slane %v16, 3
    %v44 = vmul.f32 %v41, %v43
    %v45 = vadd.f32 %v38, %v44
    %v47 = vperm.slane %v17, 0
    %v49 = vadd.f32 %v45, %v47
    %vm50 = vcmask 48128
    %51 = vst.msk [vmem:[#allocation2] sm:$0xff] %vm50, %v49
    // Predicated region
    $region14: #{tpu_custom_call.1} parent=1 // pred_check
      _
    $region15: #{tpu_custom_call.1} parent=1 // pred_check_branch
      %53 = sbr.rel (0) target = $region17
    $region16: #{tpu_custom_call.1} parent=1 // pred_region
      %55 = vsyncadd [#allocation3], 0
      %s57 = sshll.u32 [#allocation2], 4
      %s58 = int_to_ptr.vmem [resolvable:$true] %s57
      %s59 = sshll.u32 %s3, 4
      %s60 = int_to_ptr.hbm [resolvable:$true] %s59
      %62 = dma.vmem_to_hbm [thread:$0]  %s58, 128, %s60, [#allocation3]
    $region17: #{tpu_custom_call.1} parent=1 // pred_fallthru
      _
    // Predicated region
    $region18: #{tpu_custom_call.1} parent=1 // pred_check
      _
    $region19: #{tpu_custom_call.1} parent=1 // pred_check_branch
      %64 = sbr.rel (0) target = $region21
    $region20: #{tpu_custom_call.1} parent=1 // pred_region
      %66 = dma.done [#allocation3], 128
    $region21: #{tpu_custom_call.1} parent=1 // pred_fallthru
      _
    %67 = vsyncpa [#allocation3], 1

</llo_original>
